<compile_context>
chip_gen: v6e
topology: v6e:2x2x1
jax: 0.10.0
libtpu: 0.0.40
codegen_flags: <defaults>
</compile_context>

<pallas_src>
import functools

import jax
import jax.numpy as jnp
from jax.experimental import pallas as pl
from jax.experimental.pallas import tpu as pltpu


def _distill_loss_kernel(student_ref, teacher_ref, labels_ref, out_ref, acc_ref, *,
                         temperature, alpha, batch, block_b, n_inner,
                         mask_inputs, mask_rows):
    p = pl.program_id(0)   # TensorCore-split axis ("parallel")
    i = pl.program_id(1)   # batch-tile axis ("arbitrary", carries the accumulator)

    @pl.when(i == 0)
    def _():
        acc_ref[...] = jnp.zeros_like(acc_ref)

    tb, c = student_ref.shape
    inv_t = 1.0 / temperature

    valid_b = None
    if mask_rows:
        # Rows past `batch` exist either because the last block is ragged or because
        # a duplicated (clamped) tile is being re-read; zero-weight them.
        row_ids = (p * n_inner + i) * block_b + jax.lax.broadcasted_iota(
            jnp.int32, (tb, 1), 0)
        valid_b = row_ids < batch                                        # (TB, 1)

    # Upcast + temperature scale in one shot; never keep raw f32 s/t live.
    zs = student_ref[...].astype(jnp.float32) * inv_t                   # (TB, C)
    zt = teacher_ref[...].astype(jnp.float32) * inv_t                   # (TB, C)
    if mask_inputs:
        # Ragged last block: out-of-bounds rows hold undefined data -> sanitize
        # BEFORE any exp so Inf/NaN can't poison the 0-weighted sum.
        zs = jnp.where(valid_b, zs, 0.0)
        zt = jnp.where(valid_b, zt, 0.0)

    # ---- student soft-target stats (log_softmax(s/T) never materialized) ----
    zs_max = jnp.max(zs, axis=1, keepdims=True)
    zs_shift = zs - zs_max
    zs_lse = jnp.log(jnp.sum(jnp.exp(zs_shift), axis=1, keepdims=True))  # (TB, 1)

    # ---- teacher stats (softmax(t/T) never materialized) ----
    zt_max = jnp.max(zt, axis=1, keepdims=True)
    zt_shift = zt - zt_max
    zt_exp = jnp.exp(zt_shift)
    zt_sum = jnp.sum(zt_exp, axis=1, keepdims=True)                      # (TB, 1)

    # ---- fused KD per row:
    #   KL = sum(p_t*(log p_t - log p_s))
    #      = sum(zt_exp*(zt_shift - zs_shift))/zt_sum + zs_lse - log(zt_sum)
    kd_num = jnp.sum(zt_exp * (zt_shift - zs_shift), axis=1, keepdims=True)
    kd_row = (kd_num * pl.reciprocal(zt_sum, approx=False)
              + zs_lse - jnp.log(zt_sum))                                # (TB, 1)

    # ---- cross entropy on the raw student logits, expressed via zs (s = T*zs):
    #   ce = lse(s) - s[label] = T*zs_max + log(sum(exp(T*zs_shift))) - T*zs[label]
    labels = labels_ref[...]                                             # (TB, 1) i32
    class_ids = jax.lax.broadcasted_iota(jnp.int32, (tb, c), 1)
    label_mask = (class_ids == labels).astype(jnp.float32)               # (TB, C)
    zs_label = jnp.sum(label_mask * zs, axis=1, keepdims=True)           # (TB, 1)
    ce_lse = jnp.log(jnp.sum(jnp.exp(zs_shift * temperature),
                             axis=1, keepdims=True))                     # (TB, 1)
    ce_row = temperature * (zs_max - zs_label) + ce_lse                  # (TB, 1)

    loss_row = alpha * ce_row + (1.0 - alpha) * kd_row                   # (TB, 1)
    if mask_rows:
        loss_row = loss_row * valid_b.astype(jnp.float32)

    acc_ref[...] += jnp.sum(loss_row, keepdims=True)                     # (1, 1)

    @pl.when(i == pl.num_programs(1) - 1)
    def _():
        out_ref[...] = jnp.reshape(acc_ref[...], out_ref.shape)

    # TODO(synk): for vocab-scale C (>= ~8-16K classes), chunk the class axis with a
    # lax.fori_loop two-pass/online softmax instead of holding (TB,C) f32 temporaries.


def _round_up(x, m):
    return ((x + m - 1) // m) * m


def _hw_defaults():
    """(num_splits, vmem_limit_bytes) chosen from the TPU generation."""
    try:
        vmem_cap = int(pltpu.get_tpu_info().vmem_capacity_bytes)
    except Exception:
        vmem_cap = None
    if vmem_cap is not None and vmem_cap >= 96 * 1024 * 1024:
        # 128 MiB VMEM parts (v5e/v6e): single TensorCore -> no split axis benefit,
        # and we can afford a bigger scoped-VMEM budget (bigger tiles, fewer steps).
        return 1, 64 * 1024 * 1024
    if vmem_cap is not None:
        # v7x-class (64 MiB / TC) but two TensorCores -> split the batch in two.
        return 2, 32 * 1024 * 1024
    # Unknown hardware: conservative.
    return 1, 32 * 1024 * 1024


def _choose_block_b(batch, num_classes, itemsize, num_splits, vmem_limit_bytes):
    # Budget ~75% of the scoped-VMEM limit across:
    #   * double-buffered DMA slabs: 2 streams x 2 buffers x C x itemsize (+ labels)
    #   * live in-kernel f32 temporaries (zs/zt/shifts/zt_exp/label-mask): ~8 x C x 4
    budget = int(vmem_limit_bytes * 0.75)
    per_row = 2 * 2 * num_classes * itemsize + 8 * num_classes * 4 + 2 * 4
    tb = budget // max(per_row, 1)
    tb = max(8, min(512, (tb // 8) * 8))
    tb = min(tb, _round_up(max(pl.cdiv(batch, num_splits), 1), 8))
    return int(tb)


def distillation_loss(student_logits, teacher_logits, true_labels,
                      temperature=5.0, alpha=0.5, num_splits=None,
                      vmem_limit_bytes=None):
    """student_logits, teacher_logits: (B, C) f32/bf16; true_labels: (B,) int."""
    B, C = student_logits.shape
    auto_splits, auto_vmem = _hw_defaults()
    if num_splits is None:
        num_splits = auto_splits
    if vmem_limit_bytes is None:
        vmem_limit_bytes = auto_vmem

    itemsize = jnp.dtype(student_logits.dtype).itemsize
    tb = _choose_block_b(B, C, itemsize, num_splits, vmem_limit_bytes)

    n_blocks = pl.cdiv(B, tb)
    n_inner = pl.cdiv(n_blocks, num_splits)
    max_block = n_blocks - 1

    # No wrapper-side padding: ragged / duplicated tiles are handled in-kernel.
    mask_inputs = (B % tb) != 0                       # last real block is ragged
    mask_rows = (num_splits * n_inner * tb) != B      # any row index >= B exists

    labels2d = true_labels.astype(jnp.int32).reshape(B, 1)

    kernel = functools.partial(
        _distill_loss_kernel,
        temperature=float(temperature),
        alpha=float(alpha),
        batch=B,
        block_b=tb,
        n_inner=n_inner,
        mask_inputs=mask_inputs,
        mask_rows=mask_rows,
    )

    def blk_map(p, i):
        # Clamp so duplicated trailing tiles re-read a valid block (contributions
        # from their rows are zeroed by the in-kernel validity mask).
        return (jnp.minimum(p * n_inner + i, max_block), 0)

    grid_spec = pltpu.PrefetchScalarGridSpec(
        num_scalar_prefetch=0,
        grid=(num_splits, n_inner),
        in_specs=[
            pl.BlockSpec((tb, C), blk_map),
            pl.BlockSpec((tb, C), blk_map),
            pl.BlockSpec((tb, 1), blk_map),
        ],
        out_specs=pl.BlockSpec((1, 1, 1), lambda p, i: (p, 0, 0)),
        scratch_shapes=[pltpu.VMEM((1, 1), jnp.float32)],
    )

    partial_sums = pl.pallas_call(
        kernel,
        out_shape=jax.ShapeDtypeStruct((num_splits, 1, 1), jnp.float32),
        grid_spec=grid_spec,
        compiler_params=pltpu.CompilerParams(
            # TODO(synk): on v7x, verify plain "parallel" shards the leading axis
            # across both TensorCores; otherwise switch it to pltpu.CORE_PARALLEL.
            dimension_semantics=("parallel", "arbitrary"),
            vmem_limit_bytes=int(vmem_limit_bytes),
        ),
    )(student_logits, teacher_logits, labels2d)

    # Per-split partial sums; 1/B (CE mean + KLDiv 'batchmean') applied here once.
    return jnp.sum(partial_sums) * (1.0 / B)


def _reference(student_logits, teacher_logits, true_labels,
               temperature=5.0, alpha=0.5):
    # Pure-JAX reference mirroring the PyTorch module's forward.
    s = student_logits.astype(jnp.float32)
    t = teacher_logits.astype(jnp.float32)
    log_p_s = jax.nn.log_softmax(s / temperature, axis=1)
    p_t = jax.nn.softmax(t / temperature, axis=1)
    log_p_t = jax.nn.log_softmax(t / temperature, axis=1)
    B = s.shape[0]
    kd = jnp.sum(p_t * (log_p_t - log_p_s)) / B           # KLDivLoss 'batchmean'
    log_probs = jax.nn.log_softmax(s, axis=1)
    ce = -jnp.mean(jnp.take_along_axis(log_probs, true_labels[:, None], axis=1))
    # NOTE: the spec module does NOT apply the Hinton T**2 scaling; neither do we.
    return alpha * ce + (1 - alpha) * kd


if __name__ == "__main__":
    key = jax.random.PRNGKey(0)
    k1, k2, k3 = jax.random.split(key, 3)

    # Case 1: small f32 batch / class count (tile-aligned path).
    B, C = 8, 32
    student = jax.random.normal(k1, (B, C), dtype=jnp.float32)
    teacher = jax.random.normal(k2, (B, C), dtype=jnp.float32)
    labels = jax.random.randint(k3, (B,), 0, C, dtype=jnp.int32)

    loss = jax.block_until_ready(
        distillation_loss(student, teacher, labels, temperature=5.0, alpha=0.5))
    ref = _reference(student, teacher, labels, temperature=5.0, alpha=0.5)
    assert jnp.allclose(loss, ref, atol=1e-5, rtol=1e-5), (loss, ref)

    # Case 2: ragged batch (in-kernel masking, no wrapper pad) + bf16 logits
    # (in-kernel upcast path).
    B2, C2 = 10, 48
    k4, k5, k6 = jax.random.split(k3, 3)
    student2 = jax.random.normal(k4, (B2, C2), dtype=jnp.float32).astype(jnp.bfloat16)
    teacher2 = jax.random.normal(k5, (B2, C2), dtype=jnp.float32).astype(jnp.bfloat16)
    labels2 = jax.random.randint(k6, (B2,), 0, C2, dtype=jnp.int32)

    loss2 = jax.block_until_ready(
        distillation_loss(student2, teacher2, labels2, temperature=2.0, alpha=0.3))
    ref2 = _reference(student2, teacher2, labels2, temperature=2.0, alpha=0.3)
    assert jnp.allclose(loss2, ref2, atol=2e-3, rtol=2e-3), (loss2, ref2)

    print("KERNEL_OK")
</pallas_src>

<mosaic_0001>
module attributes {stable_mosaic.version = 11 : i64} {
  func.func @_distill_loss_kernel(%arg0: i32, %arg1: i32, %arg2: memref<8x32xf32, #tpu.memory_space<vmem>>, %arg3: memref<8x32xf32, #tpu.memory_space<vmem>>, %arg4: memref<8x1xi32, #tpu.memory_space<vmem>>, %arg5: memref<1x1x1xf32, #tpu.memory_space<vmem>>, %arg6: memref<1x1xf32, #tpu.memory_space<vmem>>) attributes {dimension_semantics = [#tpu.dimension_semantics<parallel>, #tpu.dimension_semantics<arbitrary>], iteration_bounds = array<i64: 1, 1>, scalar_prefetch = 0 : i64, scratch_operands = 1 : i64, tpu.core_type = #tpu.core_type<tc>, window_params = [{transform_indices = @transform_0, window_bounds = array<i64: 8, 32>}, {transform_indices = @transform_1, window_bounds = array<i64: 8, 32>}, {transform_indices = @transform_2, window_bounds = array<i64: 8, 1>}, {transform_indices = @transform_3, window_bounds = array<i64: 1, 1, 1>}]} {
    %c0_i32 = arith.constant 0 : i32
    %0 = arith.cmpi eq, %arg1, %c0_i32 : i32
    %1 = arith.extui %0 : i1 to i32
    %c0_i32_0 = arith.constant 0 : i32
    %2 = arith.cmpi ne, %1, %c0_i32_0 : i32
    scf.if %2 {
      %cst_25 = arith.constant 0.000000e+00 : f32
      %68 = vector.broadcast %cst_25 : f32 to vector<1x1xf32>
      %c0_26 = arith.constant 0 : index
      %c0_27 = arith.constant 0 : index
      %69 = vector.load %arg6[%c0_26, %c0_27] : memref<1x1xf32, #tpu.memory_space<vmem>>, vector<1x1xf32>
      tpu.vector_store %arg6[%c0_26, %c0_27], %68 {strides = array<i32>} : memref<1x1xf32, #tpu.memory_space<vmem>>, vector<1x1xf32>,
    } else {
    }
    %c0 = arith.constant 0 : index
    %c0_1 = arith.constant 0 : index
    %3 = vector.load %arg2[%c0, %c0_1] : memref<8x32xf32, #tpu.memory_space<vmem>>, vector<8x32xf32>
    %cst = arith.constant 2.000000e-01 : f32
    %4 = vector.broadcast %cst : f32 to vector<8x32xf32>
    %5 = arith.mulf %3, %4 : vector<8x32xf32>
    %c0_2 = arith.constant 0 : index
    %c0_3 = arith.constant 0 : index
    %6 = vector.load %arg3[%c0_2, %c0_3] : memref<8x32xf32, #tpu.memory_space<vmem>>, vector<8x32xf32>
    %cst_4 = arith.constant 2.000000e-01 : f32
    %7 = vector.broadcast %cst_4 : f32 to vector<8x32xf32>
    %8 = arith.mulf %6, %7 : vector<8x32xf32>
    %cst_5 = arith.constant dense<0xFF800000> : vector<8xf32>
    %9 = vector.multi_reduction <maximumf>, %5, %cst_5 [1] : vector<8x32xf32> to vector<8xf32>
    %10 = vector.shape_cast %9 : vector<8xf32> to vector<8x1xf32>
    %11 = vector.broadcast %10 : vector<8x1xf32> to vector<8x32xf32>
    %12 = arith.subf %5, %11 : vector<8x32xf32>
    %13 = math.exp %12 : vector<8x32xf32>
    %cst_6 = arith.constant dense<0.000000e+00> : vector<8xf32>
    %14 = vector.multi_reduction <add>, %13, %cst_6 [1] : vector<8x32xf32> to vector<8xf32>
    %15 = vector.shape_cast %14 : vector<8xf32> to vector<8x1xf32>
    %16 = math.log %15 : vector<8x1xf32>
    %cst_7 = arith.constant dense<0xFF800000> : vector<8xf32>
    %17 = vector.multi_reduction <maximumf>, %8, %cst_7 [1] : vector<8x32xf32> to vector<8xf32>
    %18 = vector.shape_cast %17 : vector<8xf32> to vector<8x1xf32>
    %19 = vector.broadcast %18 : vector<8x1xf32> to vector<8x32xf32>
    %20 = arith.subf %8, %19 : vector<8x32xf32>
    %21 = math.exp %20 : vector<8x32xf32>
    %cst_8 = arith.constant dense<0.000000e+00> : vector<8xf32>
    %22 = vector.multi_reduction <add>, %21, %cst_8 [1] : vector<8x32xf32> to vector<8xf32>
    %23 = vector.shape_cast %22 : vector<8xf32> to vector<8x1xf32>
    %24 = arith.subf %20, %12 : vector<8x32xf32>
    %25 = arith.mulf %21, %24 : vector<8x32xf32>
    %cst_9 = arith.constant dense<0.000000e+00> : vector<8xf32>
    %26 = vector.multi_reduction <add>, %25, %cst_9 [1] : vector<8x32xf32> to vector<8xf32>
    %27 = vector.shape_cast %26 : vector<8xf32> to vector<8x1xf32>
    %28 = tpu.reciprocal %23 : vector<8x1xf32> -> vector<8x1xf32>
    %29 = arith.mulf %27, %28 : vector<8x1xf32>
    %30 = arith.addf %29, %16 : vector<8x1xf32>
    %31 = math.log %23 : vector<8x1xf32>
    %32 = arith.subf %30, %31 : vector<8x1xf32>
    %c0_10 = arith.constant 0 : index
    %c0_11 = arith.constant 0 : index
    %33 = vector.load %arg4[%c0_10, %c0_11] : memref<8x1xi32, #tpu.memory_space<vmem>>, vector<8x1xi32>
    %34 = tpu.iota {dimensions = array<i32: 1>} : vector<8x32xi32>
    %35 = vector.broadcast %33 : vector<8x1xi32> to vector<8x32xi32>
    %36 = arith.cmpi eq, %34, %35 : vector<8x32xi32>
    %37 = arith.extui %36 : vector<8x32xi1> to vector<8x32xi32>
    %38 = arith.sitofp %37 : vector<8x32xi32> to vector<8x32xf32>
    %39 = arith.mulf %38, %5 : vector<8x32xf32>
    %cst_12 = arith.constant dense<0.000000e+00> : vector<8xf32>
    %40 = vector.multi_reduction <add>, %39, %cst_12 [1] : vector<8x32xf32> to vector<8xf32>
    %41 = vector.shape_cast %40 : vector<8xf32> to vector<8x1xf32>
    %cst_13 = arith.constant 5.000000e+00 : f32
    %42 = vector.broadcast %cst_13 : f32 to vector<8x32xf32>
    %43 = arith.mulf %12, %42 : vector<8x32xf32>
    %44 = math.exp %43 : vector<8x32xf32>
    %cst_14 = arith.constant dense<0.000000e+00> : vector<8xf32>
    %45 = vector.multi_reduction <add>, %44, %cst_14 [1] : vector<8x32xf32> to vector<8xf32>
    %46 = vector.shape_cast %45 : vector<8xf32> to vector<8x1xf32>
    %47 = math.log %46 : vector<8x1xf32>
    %48 = arith.subf %10, %41 : vector<8x1xf32>
    %cst_15 = arith.constant 5.000000e+00 : f32
    %49 = vector.broadcast %cst_15 : f32 to vector<8x1xf32>
    %50 = arith.mulf %49, %48 : vector<8x1xf32>
    %51 = arith.addf %50, %47 : vector<8x1xf32>
    %cst_16 = arith.constant 5.000000e-01 : f32
    %52 = vector.broadcast %cst_16 : f32 to vector<8x1xf32>
    %53 = arith.mulf %52, %51 : vector<8x1xf32>
    %cst_17 = arith.constant 5.000000e-01 : f32
    %54 = vector.broadcast %cst_17 : f32 to vector<8x1xf32>
    %55 = arith.mulf %54, %32 : vector<8x1xf32>
    %56 = arith.addf %53, %55 : vector<8x1xf32>
    %c0_18 = arith.constant 0 : index
    %c0_19 = arith.constant 0 : index
    %57 = vector.load %arg6[%c0_18, %c0_19] : memref<1x1xf32, #tpu.memory_space<vmem>>, vector<1x1xf32>
    %58 = vector.shape_cast %56 : vector<8x1xf32> to vector<1x8x1xf32>
    %cst_20 = arith.constant dense<0.000000e+00> : vector<1xf32>
    %59 = vector.multi_reduction <add>, %58, %cst_20 [1, 2] : vector<1x8x1xf32> to vector<1xf32>
    %60 = vector.shape_cast %59 : vector<1xf32> to vector<1x1x1xf32>
    %61 = vector.extract %60[0, 0, 0] : f32 from vector<1x1x1xf32>
    %62 = vector.broadcast %61 : f32 to vector<1x1xf32>
    %63 = arith.addf %57, %62 : vector<1x1xf32>
    %c0_21 = arith.constant 0 : index
    %c0_22 = arith.constant 0 : index
    %64 = vector.load %arg6[%c0_21, %c0_22] : memref<1x1xf32, #tpu.memory_space<vmem>>, vector<1x1xf32>
    tpu.vector_store %arg6[%c0_21, %c0_22], %63 {strides = array<i32>} : memref<1x1xf32, #tpu.memory_space<vmem>>, vector<1x1xf32>,
    %c0_i32_23 = arith.constant 0 : i32
    %65 = arith.cmpi eq, %arg1, %c0_i32_23 : i32
    %66 = arith.extui %65 : i1 to i32
    %c0_i32_24 = arith.constant 0 : i32
    %67 = arith.cmpi ne, %66, %c0_i32_24 : i32
    scf.if %67 {
      %c0_25 = arith.constant 0 : index
      %c0_26 = arith.constant 0 : index
      %68 = vector.load %arg6[%c0_25, %c0_26] : memref<1x1xf32, #tpu.memory_space<vmem>>, vector<1x1xf32>
      %69 = vector.shape_cast %68 : vector<1x1xf32> to vector<1x1x1xf32>
      %c0_27 = arith.constant 0 : index
      %c0_28 = arith.constant 0 : index
      %c0_29 = arith.constant 0 : index
      %70 = vector.load %arg5[%c0_27, %c0_28, %c0_29] : memref<1x1x1xf32, #tpu.memory_space<vmem>>, vector<1x1x1xf32>
      tpu.vector_store %arg5[%c0_27, %c0_28, %c0_29], %69 {strides = array<i32>} : memref<1x1x1xf32, #tpu.memory_space<vmem>>, vector<1x1x1xf32>,
    } else {
    }
    return
  }
  func.func @transform_0(%arg0: i32, %arg1: i32) -> (i32, i32) {
    %c1_i32 = arith.constant 1 : i32
    %0 = arith.muli %arg0, %c1_i32 : i32
    %1 = arith.addi %0, %arg1 : i32
    %c0_i32 = arith.constant 0 : i32
    %2 = arith.minsi %1, %c0_i32 : i32
    %c0_i32_0 = arith.constant 0 : i32
    %c0_i32_1 = arith.constant 0 : i32
    return %2, %c0_i32_0 : i32, i32
  }
  func.func @transform_1(%arg0: i32, %arg1: i32) -> (i32, i32) {
    %c1_i32 = arith.constant 1 : i32
    %0 = arith.muli %arg0, %c1_i32 : i32
    %1 = arith.addi %0, %arg1 : i32
    %c0_i32 = arith.constant 0 : i32
    %2 = arith.minsi %1, %c0_i32 : i32
    %c0_i32_0 = arith.constant 0 : i32
    %c0_i32_1 = arith.constant 0 : i32
    return %2, %c0_i32_0 : i32, i32
  }
  func.func @transform_2(%arg0: i32, %arg1: i32) -> (i32, i32) {
    %c1_i32 = arith.constant 1 : i32
    %0 = arith.muli %arg0, %c1_i32 : i32
    %1 = arith.addi %0, %arg1 : i32
    %c0_i32 = arith.constant 0 : i32
    %2 = arith.minsi %1, %c0_i32 : i32
    %c0_i32_0 = arith.constant 0 : i32
    %c0_i32_1 = arith.constant 0 : i32
    return %2, %c0_i32_0 : i32, i32
  }
  func.func @transform_3(%arg0: i32, %arg1: i32) -> (i32, i32, i32) {
    %c0_i32 = arith.constant 0 : i32
    %c0_i32_0 = arith.constant 0 : i32
    %c0_i32_1 = arith.constant 0 : i32
    return %arg0, %c0_i32, %c0_i32_0 : i32, i32, i32
  }
}

</mosaic_0001>

<llo_original>
// kernel: tpu_custom_call.1
$region0: #{tpu_custom_call.1}
  #allocation0 [shape = 'u32[]', space=smem, size = 0x4, offset = 0x4, fixed_abs, tag = 'smem constant byte address 0x4 - core index']
  #allocation1 [shape = 'u32[144,128]{1,0:T(1,128)}', space=vmem, size = 0x12000, scoped, tag = 'internal scratch']
  #allocation2 [shape = 'f32[1,1]{1,0:T(1,128)}', space=vmem, size = 0x200, scoped, tag = 'scratch operand']
  %s0 = inlined_call_operand.vmem [shape: f32[8,32], index: 0, kind: input, shape index: {}]
  %s1 = inlined_call_operand.hbm [shape: f32[8,32], index: 1, kind: input, shape index: {}]
  %s2 = inlined_call_operand.vmem [shape: s32[8,1], index: 2, kind: input, shape index: {}]
  %s3 = inlined_call_operand.hbm [shape: f32[1,1,1], index: 3, kind: output, shape index: {}]
  %s4 = sld [smem:[#allocation0]]
  $region34: #{tpu_custom_call.1} parent=0
    _
  %s6 = ssub.s32 1, %s4
  %s7 = scalar_select 0, %s6, %s4
  $region1: #{tpu_custom_call.1} parent=0
    #allocation3 [shape = 'u8[4096]{0}', space=vmem, size = 0x1000, scoped, tag = 'input window, operand 1, single buffered']
    #allocation4 [shape = 's32[1]{0}', space=sflag, size = 0x4, scoped, tag = 'scoped memory for tpu_custom_call.1']
    #allocation5 [shape = 's32[1]{0}', space=sflag, size = 0x4, scoped, tag = 'scoped memory for tpu_custom_call.1']
    #allocation6 [shape = 'u8[512]{0}', space=vmem, size = 0x400, scoped, tag = 'output window, operand 0, single buffered']
    %8 = vsyncpa [#allocation4], 0
    %9 = vsyncpa [#allocation5], 0
    // Predicated region
    $region2: #{tpu_custom_call.1} parent=1 // pred_check
      _
    $region3: #{tpu_custom_call.1} parent=1 // pred_check_branch
      %11 = sbr.rel (0) target = $region5
    $region4: #{tpu_custom_call.1} parent=1 // pred_region
      %s12 = sadd.s32 0, 0
      %p13 = scmp.lt.s32.totalorder %s12, 0
      %s14 = scalar_select %p13, %s12, 0
      %p15 = scmp.lt.s32.totalorder %s14, 0
      %s16 = scalar_select %p15, %s14, 0
      %s17 = smul.addr %s16, 8
      %s18 = scalar_lea.vmem %s0, %s17
      %s19 = sadd.s32 0, 0
      %p20 = scmp.lt.s32.totalorder %s19, 0
      %s21 = scalar_select %p20, %s19, 0
    $region5: #{tpu_custom_call.1} parent=1 // pred_fallthru
      _
    // Predicated region
    $region6: #{tpu_custom_call.1} parent=1 // pred_check
      _
    $region7: #{tpu_custom_call.1} parent=1 // pred_check_branch
      %23 = sbr.rel (0) target = $region9
    $region8: #{tpu_custom_call.1} parent=1 // pred_region
      %s24 = sadd.s32 0, 0
      %p25 = scmp.lt.s32.totalorder %s24, 0
      %s26 = scalar_select %p25, %s24, 0
      %s28 = ssub.s32 128, 128
      %29 = vsyncadd [#allocation4], %s28
      %s30 = smul.addr %s26, 128
      %s31 = scalar_lea.hbm %s1, %s30
      %s33 = sshll.u32 [#allocation3], 4
      %s34 = int_to_ptr.vmem [resolvable:$true] %s33
      %36 = dma.hbm_to_vmem [thread:$0]  %s31, 128, %s34, [#allocation4]
    $region9: #{tpu_custom_call.1} parent=1 // pred_fallthru
      _
    // Predicated region
    $region10: #{tpu_custom_call.1} parent=1 // pred_check
      _
    $region11: #{tpu_custom_call.1} parent=1 // pred_check_branch
      %38 = sbr.rel (0) target = $region13
    $region12: #{tpu_custom_call.1} parent=1 // pred_region
      %s39 = sadd.s32 0, 0
      %p40 = scmp.lt.s32.totalorder %s39, 0
      %s41 = scalar_select %p40, %s39, 0
      %p42 = scmp.lt.s32.totalorder %s41, 0
      %s43 = scalar_select %p42, %s41, 0
      %s44 = smul.addr %s43, 8
      %s45 = scalar_lea.vmem %s2, %s44
      %s46 = sadd.s32 0, 0
      %p47 = scmp.lt.s32.totalorder %s46, 0
      %s48 = scalar_select %p47, %s46, 0
    $region13: #{tpu_custom_call.1} parent=1 // pred_fallthru
      _
    // Predicated region
    $region14: #{tpu_custom_call.1} parent=1 // pred_check
      _
    $region15: #{tpu_custom_call.1} parent=1 // pred_check_branch
      %50 = sbr.rel (0) target = $region17
    $region16: #{tpu_custom_call.1} parent=1 // pred_region
      %51 = dma.done [#allocation4], 128
    $region17: #{tpu_custom_call.1} parent=1 // pred_fallthru
      _
    %s52 = sadd.s32 0, 0
    %p53 = scmp.lt.s32.totalorder %s52, 0
    %s54 = scalar_select %p53, %s52, 0
    %p55 = scmp.lt.s32.totalorder %s54, 0
    %s56 = scalar_select %p55, %s54, 0
    %s57 = smul.addr %s56, 8
    %s58 = scalar_lea.vmem %s0, %s57
    %s59 = sadd.s32 0, 0
    %p60 = scmp.lt.s32.totalorder %s59, 0
    %s61 = scalar_select %p60, %s59, 0
    %p62 = scmp.lt.s32.totalorder %s61, 0
    %s63 = scalar_select %p62, %s61, 0
    %s64 = smul.addr %s63, 8
    %s65 = scalar_lea.vmem %s2, %s64
    %s66 = sadd.s32 0, 0
    %p67 = scmp.lt.s32.totalorder %s66, 0
    %s68 = scalar_select %p67, %s66, 0
    %p69 = scmp.lt.s32.totalorder %s68, 0
    %s70 = scalar_select %p69, %s68, 0
    %s71 = smul.addr %s70, 8
    %s72 = scalar_lea.vmem %s0, %s71
    %s73 = sadd.s32 0, 0
    %p74 = scmp.lt.s32.totalorder %s73, 0
    %s75 = scalar_select %p74, %s73, 0
    %s76 = sadd.s32 0, 0
    %p77 = scmp.lt.s32.totalorder %s76, 0
    %s78 = scalar_select %p77, %s76, 0
    %s79 = sadd.s32 0, 0
    %p80 = scmp.lt.s32.totalorder %s79, 0
    %s81 = scalar_select %p80, %s79, 0
    %p82 = scmp.lt.s32.totalorder %s81, 0
    %s83 = scalar_select %p82, %s81, 0
    %s84 = smul.addr %s83, 8
    %s85 = scalar_lea.vmem %s2, %s84
    %s86 = sadd.s32 0, 0
    %p87 = scmp.lt.s32.totalorder %s86, 0
    %s88 = scalar_select %p87, %s86, 0
    %p89 = scmp.eq.s32.totalorder 0, 0
    // Predicated region
    $region18: #{tpu_custom_call.1} parent=1 // pred_check
      %p90 = pneg %p89
    $region19: #{tpu_custom_call.1} parent=1 // pred_check_branch
      %92 = sbr.rel (%p90) target = $region21
    $region20: #{tpu_custom_call.1} parent=1 // pred_region
      %vm93 = vcmask 0
      %94 = vst.msk [vmem:[#allocation2] sm:$0x1] %vm93, 0.0
    $region21: #{tpu_custom_call.1} parent=1 // pred_fallthru
      _
    %v95 = vld [vmem:[%s72] sm:$0xff]
    %v96 = vmul.f32 %v95, 0.2
    %v97 = vld [vmem:[#allocation3] sm:$0xff]
    %v98 = vmul.f32 %v97, 0.2
    %vm99 = vcmask 261120
    %v100 = vsel %vm99, %v96, -inf
    %101 = vmax.xlane.f32.xlu0 %v100
    %v102 = vpop.xlane.xlu0 %101
    %v103 = vsub.f32 %v96, %v102
    %v104 = vmul.f32 %v103, 1.442695
    %v105 = vpow.pop %v104
    %v106 = vsel %vm99, %v105, 0.0
    %107 = vadd.xlane.f32.xlu0 %v106
    %v108 = vpop.xlane.xlu0 %107
    %v109 = vlog2.pop %v108
    %v110 = vmul.f32 %v109, 0.6931472
    %v111 = vsel %vm99, %v98, -inf
    %112 = vmax.xlane.f32.xlu0 %v111
    %v113 = vpop.xlane.xlu0 %112
    %v114 = vsub.f32 %v98, %v113
    %v115 = vmul.f32 %v114, 1.442695
    %v116 = vpow.pop %v115
    %v117 = vsel %vm99, %v116, 0.0
    %118 = vadd.xlane.f32.xlu0 %v117
    %v119 = vpop.xlane.xlu0 %118
    %v120 = vsub.f32 %v114, %v103
    %v121 = vmul.f32 %v116, %v120
    %v122 = vsel %vm99, %v121, 0.0
    %123 = vadd.xlane.f32.xlu0 %v122
    %v124 = vpop.xlane.xlu0 %123
    %v125 = vrcp.pop %v119
    %v126 = vmul.f32 %v124, %v125
    %v127 = vadd.f32 %v126, %v110
    %v128 = vlog2.pop %v119
    %v129 = vmul.f32 %v128, 0.6931472
    %v130 = vsub.f32 %v127, %v129
    %v131 = vld [vmem:[%s85] sm:$0xff]
    %v132 = vlaneseq
    %v133 = vand.u32 %v132, 127
    %134 = vset.pattern.permute.xlu0 0
    %135 = vperm.xlu0 %134, %v131
    %v136 = vpop.permute.xlu0 %135
    %vm137 = vcmp.eq.s32.totalorder %v133, %v136
    %v138 = vsel %vm137, 1, 0
    %v139 = vcvt.s32.f32 %v138
    %v140 = vmul.f32 %v139, %v96
    %v141 = vsel %vm99, %v140, 0.0
    %142 = vadd.xlane.f32.xlu0 %v141
    %v143 = vpop.xlane.xlu0 %142
    %v144 = vmul.f32 %v103, 5.0
    %v145 = vmul.f32 %v144, 1.442695
    %v146 = vpow.pop %v145
    %v147 = vsel %vm99, %v146, 0.0
    %148 = vadd.xlane.f32.xlu0 %v147
    %v149 = vpop.xlane.xlu0 %148
    %v150 = vlog2.pop %v149
    %v151 = vmul.f32 %v150, 0.6931472
    %v152 = vsub.f32 %v102, %v143
    %v153 = vmul.f32 %v152, 5.0
    %v154 = vadd.f32 %v153, %v151
    %v155 = vmul.f32 %v154, 0.5
    %v156 = vmul.f32 %v130, 0.5
    %v157 = vadd.f32 %v155, %v156
    %v158 = vld [vmem:[#allocation2] sm:$0x1]
    %vm159 = vcmask 7168
    %v160 = vsel %vm159, %v157, 0.0
    %161 = vadd.xlane.f32.xlu0 %v160
    %v162 = vpop.xlane.xlu0 %161
    %v163 = vrot.slane %v162, 4
    %v164 = vadd.f32 %v162, %v163
    %v165 = vrot.slane %v164, 2
    %v166 = vadd.f32 %v164, %v165
    %v167 = vrot.slane %v166, 1
    %v168 = vadd.f32 %v166, %v167
    %s169 = vtos %v168
    %v170 = vstv %s169
    %v171 = vadd.f32 %v158, %v170
    %vm172 = vcmask 0
    %173 = vst.msk [vmem:[#allocation2] sm:$0x1] %vm172, %v171
    // Predicated region
    $region22: #{tpu_custom_call.1} parent=1 // pred_check
      %p174 = pneg %p89
    $region23: #{tpu_custom_call.1} parent=1 // pred_check_branch
      %176 = sbr.rel (%p174) target = $region25
    $region24: #{tpu_custom_call.1} parent=1 // pred_region
      %v177 = vld [vmem:[#allocation2] sm:$0x1]
      %178 = vst.msk [vmem:[#allocation6] sm:$0x1] %vm172, %v177
    $region25: #{tpu_custom_call.1} parent=1 // pred_fallthru
      _
    // Predicated region
    $region26: #{tpu_custom_call.1} parent=1 // pred_check
      _
    $region27: #{tpu_custom_call.1} parent=1 // pred_check_branch
      %180 = sbr.rel (0) target = $region29
    $region28: #{tpu_custom_call.1} parent=1 // pred_region
      %s182 = ssub.s32 16, 16
      %183 = vsyncadd [#allocation5], %s182
      %s185 = sshll.u32 [#allocation6], 4
      %s186 = int_to_ptr.vmem [resolvable:$true] %s185
      %188 = dma.vmem_to_hbm [thread:$0]  %s186, 16, %s3, [#allocation5]
    $region29: #{tpu_custom_call.1} parent=1 // pred_fallthru
      _
    // Predicated region
    $region30: #{tpu_custom_call.1} parent=1 // pred_check
      _
    $region31: #{tpu_custom_call.1} parent=1 // pred_check_branch
      %190 = sbr.rel (0) target = $region33
    $region32: #{tpu_custom_call.1} parent=1 // pred_region
      %191 = dma.done [#allocation5], 16
    $region33: #{tpu_custom_call.1} parent=1 // pred_fallthru
      _
    %192 = vsyncpa [#allocation4], 1
    %193 = vsyncpa [#allocation5], 1

</llo_original>
